<compile_context>
chip_gen: v7x
topology: tpu7x:2x2x1
jax: 0.10.0
libtpu: 0.0.40
codegen_flags: <defaults>
</compile_context>

<pallas_src>
import functools

import jax
import jax.numpy as jnp
from jax.experimental import pallas as pl
from jax.experimental.pallas import tpu as pltpu


# --------------------------------------------------------------------------- #
# Kernels
# --------------------------------------------------------------------------- #
def _ce_lse_single_kernel(logits_ref, lse_ref):
    """Single class tile: full class dim in one block -> direct logsumexp."""
    x = logits_ref[...].astype(jnp.float32)                  # (tile_n, C)
    m = jnp.max(x, axis=-1, keepdims=True)
    l = jnp.sum(jnp.exp(x - m), axis=-1, keepdims=True)
    lse_ref[...] = m + jnp.log(l)


def _ce_lse_stream_kernel(logits_ref, lse_ref, m_ref, l_ref, *, num_classes, mask_tail):
    """Streaming (online) logsumexp over class tiles.

    Scratch (both (tile_n, 1) f32, persistent across the class-tile axis):
      m_ref: running max of logits      l_ref: running sum of exp(x - m)
    """
    j = pl.program_id(1)

    @pl.when(j == 0)
    def _init():
        m_ref[...] = jnp.full(m_ref.shape, -1e30, dtype=jnp.float32)
        l_ref[...] = jnp.zeros(l_ref.shape, dtype=jnp.float32)

    x = logits_ref[...].astype(jnp.float32)                  # (tile_n, tile_c)

    if mask_tail:
        # Only reached when C % tile_c != 0.  Local (loop-invariant) iota vs a
        # shifted scalar; no per-element global index add.
        tile_c = x.shape[-1]
        local_ids = jax.lax.broadcasted_iota(jnp.int32, x.shape, 1)
        x = jnp.where(local_ids < (num_classes - j * tile_c), x, -jnp.inf)

    m_prev = m_ref[...]
    m_new = jnp.maximum(m_prev, jnp.max(x, axis=-1, keepdims=True))
    alpha = jnp.exp(m_prev - m_new)
    l_ref[...] = alpha * l_ref[...] + jnp.sum(jnp.exp(x - m_new), axis=-1, keepdims=True)
    m_ref[...] = m_new

    @pl.when(j == pl.num_programs(1) - 1)
    def _finalize():
        lse_ref[...] = m_ref[...] + jnp.log(l_ref[...])


# --------------------------------------------------------------------------- #
# Tiling / VMEM heuristics
# --------------------------------------------------------------------------- #
def _device_kind():
    try:
        return jax.devices()[0].device_kind.lower()
    except Exception:
        return ""


def _vmem_and_budget():
    """Return (logits double-buffer budget, vmem_limit_bytes, row_shards)."""
    kind = _device_kind()
    try:
        vmem = int(pltpu.get_tpu_info().vmem_capacity_bytes)
    except Exception:
        vmem = 64 * 1024 * 1024                 # conservative fallback
    if "v7" in kind:
        vmem = min(vmem, 64 * 1024 * 1024)      # 64 MiB per TensorCore on v7x
        budget = vmem // 4                      # keep headroom on v7x
        limit = vmem // 2
        row_shards = 2                          # 2 TCs/chip -> shard row tiles
    else:
        vmem = min(vmem, 128 * 1024 * 1024)     # 128 MiB on v5e/v6e
        budget = vmem // 2                      # bigger blocks on 128 MiB parts
        limit = (vmem * 3) // 4
        row_shards = 1
    return budget, limit, row_shards


def _choose_tiles(n_rows, n_classes, dtype_bytes, budget, row_shards):
    """Pick (tile_n, tile_c) so 2x double-buffered logits blocks fit `budget`."""
    sublane = {4: 8, 2: 16, 1: 32}.get(dtype_bytes, 8)
    row_pref = min(512, max(n_rows, 1))

    if n_classes <= 128 or 2 * row_pref * n_classes * dtype_bytes <= budget:
        tile_c = n_classes                       # single class tile (full-dim block)
    else:
        max_c = max(128, (budget // (2 * row_pref * dtype_bytes)) // 128 * 128)
        tile_c = 0
        if n_classes % 128 == 0:
            # Prefer a divisor of C (multiple of 128) -> tail mask statically elided.
            c128 = n_classes // 128
            for d in range(1, int(c128 ** 0.5) + 1):
                if c128 % d == 0:
                    for f in (d, c128 // d):
                        cand = f * 128
                        if cand <= max_c:
                            tile_c = max(tile_c, cand)
        if tile_c == 0:
            tile_c = min(max_c, ((n_classes + 127) // 128) * 128)

    cap_rows = max(sublane, budget // (2 * max(tile_c, 1) * dtype_bytes))
    cap_rows = min(cap_rows, 2048)               # diminishing returns past ~2k rows
    if row_shards > 1:
        # Ensure the parallel row axis has >= row_shards programs (megacore).
        shard_rows = -(-n_rows // row_shards)
        shard_rows = -(-shard_rows // sublane) * sublane
        cap_rows = min(cap_rows, max(sublane, shard_rows))

    if cap_rows >= n_rows:
        tile_n = n_rows                          # full row dim: always a legal block
    else:
        tile_n = max(sublane, (cap_rows // sublane) * sublane)
    return tile_n, tile_c


# --------------------------------------------------------------------------- #
# Wrapper
# --------------------------------------------------------------------------- #
def cross_entropy(logits, target, *, tile_n=None, tile_c=None):
    """Mean cross-entropy over rows; matches nn.CrossEntropyLoss() defaults
    (reduction='mean', class-index targets).
    # TODO(synk): ignore_index / label_smoothing / class weights not implemented
    # (unused by the module's defaults)."""
    N, C = logits.shape
    dtype_bytes = jnp.dtype(logits.dtype).itemsize
    budget, vmem_limit, row_shards = _vmem_and_budget()

    auto_n, auto_c = _choose_tiles(N, C, dtype_bytes, budget, row_shards)
    tile_n = auto_n if tile_n is None else tile_n
    tile_c = auto_c if tile_c is None else tile_c

    grid_n = pl.cdiv(N, tile_n)
    grid_c = pl.cdiv(C, tile_c)

    if grid_c == 1:
        # Fast path: one class tile -> no scratch, no streaming, no masks.
        lse = pl.pallas_call(
            _ce_lse_single_kernel,
            out_shape=jax.ShapeDtypeStruct((N, 1), jnp.float32),
            grid_spec=pltpu.PrefetchScalarGridSpec(
                num_scalar_prefetch=0,
                grid=(grid_n,),
                in_specs=[pl.BlockSpec((tile_n, C), lambda i: (i, 0))],
                out_specs=pl.BlockSpec((tile_n, 1), lambda i: (i, 0)),
            ),
            compiler_params=pltpu.CompilerParams(
                dimension_semantics=("parallel",),
                vmem_limit_bytes=int(vmem_limit),
            ),
        )(logits)
    else:
        mask_tail = (C % tile_c) != 0            # trace-time: elide mask when divisible
        lse = pl.pallas_call(
            functools.partial(_ce_lse_stream_kernel, num_classes=C, mask_tail=mask_tail),
            out_shape=jax.ShapeDtypeStruct((N, 1), jnp.float32),
            grid_spec=pltpu.PrefetchScalarGridSpec(
                num_scalar_prefetch=0,
                grid=(grid_n, grid_c),
                in_specs=[pl.BlockSpec((tile_n, tile_c), lambda i, j: (i, j))],
                out_specs=pl.BlockSpec((tile_n, 1), lambda i, j: (i, 0)),
                scratch_shapes=[pltpu.VMEM((tile_n, 1), jnp.float32),   # running max
                                pltpu.VMEM((tile_n, 1), jnp.float32)],  # running sum-exp
            ),
            compiler_params=pltpu.CompilerParams(
                dimension_semantics=("parallel", "arbitrary"),
                vmem_limit_bytes=int(vmem_limit),
            ),
        )(logits)

    # Target-logit gather hoisted out of the kernel (tiny XLA gather, removes the
    # per-block one-hot compare/select + lane reduce + a scratch stream).
    tgt_logit = jnp.take_along_axis(
        logits, target.reshape(N, 1).astype(jnp.int32), axis=-1).astype(jnp.float32)
    per_row = lse - tgt_logit                    # loss_i = lse_i - logit_i[target_i]
    return jnp.sum(per_row) / jnp.float32(N)


def _reference_ce(logits, target):
    logp = jax.nn.log_softmax(logits.astype(jnp.float32), axis=-1)
    return -jnp.mean(jnp.take_along_axis(logp, target[:, None].astype(jnp.int32),
                                         axis=-1)[:, 0])


if __name__ == "__main__":
    key = jax.random.PRNGKey(0)
    k1, k2, k3, k4, k5, k6 = jax.random.split(key, 6)

    # Case 1: small shapes consistent with the module (batch=8, classes=32, f32)
    # -> single-class-tile fast path.
    N, C = 8, 32
    logits = jax.random.normal(k1, (N, C), dtype=jnp.float32)
    target = jax.random.randint(k2, (N,), 0, C, dtype=jnp.int32)
    loss = cross_entropy(logits, target)
    jax.block_until_ready(loss)
    ref = _reference_ce(logits, target)
    assert jnp.allclose(loss, ref, atol=1e-5, rtol=1e-5), (loss, ref)

    # Case 2: streaming class-tiled path, native bf16 HBM reads, C % tile_c == 0
    # (tail mask statically elided), parallel row axis with >1 tile.
    N2, C2 = 32, 256
    logits2 = jax.random.normal(k3, (N2, C2), dtype=jnp.float32).astype(jnp.bfloat16)
    target2 = jax.random.randint(k4, (N2,), 0, C2, dtype=jnp.int32)
    loss2 = cross_entropy(logits2, target2, tile_n=16, tile_c=128)
    jax.block_until_ready(loss2)
    ref2 = _reference_ce(logits2, target2)
    assert jnp.allclose(loss2, ref2, atol=1e-4, rtol=1e-4), (loss2, ref2)

    # Case 3: streaming path with a ragged last class tile (tail mask active).
    N3, C3 = 16, 200
    logits3 = jax.random.normal(k5, (N3, C3), dtype=jnp.float32)
    target3 = jax.random.randint(k6, (N3,), 0, C3, dtype=jnp.int32)
    loss3 = cross_entropy(logits3, target3, tile_n=8, tile_c=128)
    jax.block_until_ready(loss3)
    ref3 = _reference_ce(logits3, target3)
    assert jnp.allclose(loss3, ref3, atol=1e-5, rtol=1e-5), (loss3, ref3)

    print("KERNEL_OK")
</pallas_src>

<mosaic_0001>
module attributes {stable_mosaic.version = 11 : i64} {
  func.func @_ce_lse_single_kernel(%arg0: i32, %arg1: memref<8x32xf32, #tpu.memory_space<vmem>>, %arg2: memref<8x1xf32, #tpu.memory_space<vmem>>) attributes {dimension_semantics = [#tpu.dimension_semantics<parallel>], iteration_bounds = array<i64: 1>, scalar_prefetch = 0 : i64, scratch_operands = 0 : i64, tpu.core_type = #tpu.core_type<tc>, window_params = [{transform_indices = @transform_0, window_bounds = array<i64: 8, 32>}, {transform_indices = @transform_1, window_bounds = array<i64: 8, 1>}]} {
    %c0 = arith.constant 0 : index
    %c0_0 = arith.constant 0 : index
    %0 = vector.load %arg1[%c0, %c0_0] : memref<8x32xf32, #tpu.memory_space<vmem>>, vector<8x32xf32>
    %cst = arith.constant dense<0xFF800000> : vector<8xf32>
    %1 = vector.multi_reduction <maximumf>, %0, %cst [1] : vector<8x32xf32> to vector<8xf32>
    %2 = vector.shape_cast %1 : vector<8xf32> to vector<8x1xf32>
    %3 = vector.broadcast %2 : vector<8x1xf32> to vector<8x32xf32>
    %4 = arith.subf %0, %3 : vector<8x32xf32>
    %5 = math.exp %4 : vector<8x32xf32>
    %cst_1 = arith.constant dense<0.000000e+00> : vector<8xf32>
    %6 = vector.multi_reduction <add>, %5, %cst_1 [1] : vector<8x32xf32> to vector<8xf32>
    %7 = vector.shape_cast %6 : vector<8xf32> to vector<8x1xf32>
    %8 = math.log %7 : vector<8x1xf32>
    %9 = arith.addf %2, %8 : vector<8x1xf32>
    %c0_2 = arith.constant 0 : index
    %c0_3 = arith.constant 0 : index
    %10 = vector.load %arg2[%c0_2, %c0_3] : memref<8x1xf32, #tpu.memory_space<vmem>>, vector<8x1xf32>
    tpu.vector_store %arg2[%c0_2, %c0_3], %9 {strides = array<i32>} : memref<8x1xf32, #tpu.memory_space<vmem>>, vector<8x1xf32>,
    return
  }
  func.func @transform_0(%arg0: i32) -> (i32, i32) {
    %c0_i32 = arith.constant 0 : i32
    %c0_i32_0 = arith.constant 0 : i32
    return %arg0, %c0_i32 : i32, i32
  }
  func.func @transform_1(%arg0: i32) -> (i32, i32) {
    %c0_i32 = arith.constant 0 : i32
    %c0_i32_0 = arith.constant 0 : i32
    return %arg0, %c0_i32 : i32, i32
  }
}

</mosaic_0001>

<llo_original>
// kernel: tpu_custom_call.1
$region0: #{tpu_custom_call.1}
  #allocation0 [shape = 'u32[]', space=smem, size = 0x4, offset = 0x4, fixed_abs, tag = 'smem constant byte address 0x4 - core index']
  #allocation1 [shape = 'u32[144,128]{1,0:T(1,128)}', space=vmem, size = 0x12000, scoped, tag = 'internal scratch']
  %s0 = inlined_call_operand.hbm [shape: f32[8,32], index: 0, kind: input, shape index: {}]
  %s1 = inlined_call_operand.vmem [shape: f32[8,1], index: 1, kind: output, shape index: {}]
  %s2 = sld [smem:[#allocation0]]
  $region18: #{tpu_custom_call.1} parent=0
    _
  %s4 = ssub.s32 1, %s2
  %s5 = scalar_select 0, %s4, %s2
  $region1: #{tpu_custom_call.1} parent=0
    #allocation2 [shape = 'u8[4096]{0}', space=vmem, size = 0x1000, scoped, tag = 'input window, operand 0, single buffered']
    #allocation3 [shape = 's32[1]{0}', space=sflag, size = 0x4, scoped, tag = 'scoped memory for tpu_custom_call.1']
    %6 = vsyncpa [#allocation3], 0
    // Predicated region
    $region2: #{tpu_custom_call.1} parent=1 // pred_check
      _
    $region3: #{tpu_custom_call.1} parent=1 // pred_check_branch
      %8 = sbr.rel (0) target = $region5
    $region4: #{tpu_custom_call.1} parent=1 // pred_region
      %s10 = ssub.s32 128, 128
      %11 = vsyncadd [#allocation3], %s10
      %s13 = sshll.u32 [#allocation2], 4
      %s14 = int_to_ptr.vmem [resolvable:$true] %s13
      %16 = dma.hbm_to_vmem [thread:$0]  %s0, 128, %s14, [#allocation3]
    $region5: #{tpu_custom_call.1} parent=1 // pred_fallthru
      _
    // Predicated region
    $region6: #{tpu_custom_call.1} parent=1 // pred_check
      _
    $region7: #{tpu_custom_call.1} parent=1 // pred_check_branch
      %18 = sbr.rel (0) target = $region9
    $region8: #{tpu_custom_call.1} parent=1 // pred_region
      %19 = dma.done [#allocation3], 128
    $region9: #{tpu_custom_call.1} parent=1 // pred_fallthru
      _
    %v20 = vld [vmem:[#allocation2] sm:$0xff]
    %vm21 = vcmask 261120
    %v22 = vsel %vm21, %v20, -inf
    %23 = vmax.xlane.f32.xlu0 %v22
    %v24 = vpop.xlane.xlu0 %23
    %v25 = vsub.f32 %v20, %v24
    %v26 = vmul.f32 %v25, 1.442695
    %v27 = vpow.pop %v26
    %v28 = vsel %vm21, %v27, 0.0
    %29 = vadd.xlane.f32.xlu0 %v28
    %v30 = vpop.xlane.xlu0 %29
    %v31 = vlog2.pop %v30
    %v32 = vmul.f32 %v31, 0.6931472
    %v33 = vadd.f32 %v24, %v32
    %vm34 = vcmask 7168
    %35 = vst.msk [vmem:[%s1] sm:$0xff] %vm34, %v33
    // Predicated region
    $region10: #{tpu_custom_call.1} parent=1 // pred_check
      _
    $region11: #{tpu_custom_call.1} parent=1 // pred_check_branch
      %37 = sbr.rel (0) target = $region13
    $region12: #{tpu_custom_call.1} parent=1 // pred_region
      _
    $region13: #{tpu_custom_call.1} parent=1 // pred_fallthru
      _
    // Predicated region
    $region14: #{tpu_custom_call.1} parent=1 // pred_check
      _
    $region15: #{tpu_custom_call.1} parent=1 // pred_check_branch
      %39 = sbr.rel (0) target = $region17
    $region16: #{tpu_custom_call.1} parent=1 // pred_region
      _
    $region17: #{tpu_custom_call.1} parent=1 // pred_fallthru
      _
    %40 = vsyncpa [#allocation3], 1

</llo_original>
